<compile_context>
chip_gen: v5e
topology: v5e:2x2
jax: 0.10.0
libtpu: 0.0.40
codegen_flags: <defaults>
</compile_context>

<pallas_src>
import functools

import jax
import jax.numpy as jnp
from jax.experimental import pallas as pl
from jax.experimental.pallas import tpu as pltpu


def _round_up(x, m):
    return (x + m - 1) // m * m


def _encoder_block_kernel(x_ref, w_ref, b_ref, *rest, negative_slope, inv_keep):
    if len(rest) == 2:
        mask_ref, o_ref = rest
    else:
        (o_ref,) = rest
        mask_ref = None

    # ---- Linear: y = x @ W + b (bf16 MXU inputs, f32 accumulation) ----
    y = jnp.dot(x_ref[...].astype(jnp.bfloat16), w_ref[...],
                preferred_element_type=jnp.float32)
    y = y + b_ref[...]  # (tile_b, Dout_p) + (1, Dout_p) broadcast

    # ---- LeakyReLU(0.2): one mul + one max (valid for 0 < slope < 1) ----
    y = jnp.maximum(y, jnp.float32(negative_slope) * y)

    # ---- Dropout: int8 keep-mask -> one compare + one mul + one select ----
    if mask_ref is not None:
        keep = mask_ref[...] > 0
        y = jnp.where(keep, y * jnp.float32(inv_keep), jnp.float32(0.0))

    o_ref[...] = y.astype(o_ref.dtype)


def encoder_block(x, w, b, key=None, *, do_rate=0.0, negative_slope=0.2,
                  training=True, tile_b=None):
    """x: (B, in_dim); w: (in_dim, out_dim); b: (1, out_dim); key: PRNG key."""
    B, Din = x.shape
    Din_w, Dout = w.shape
    assert Din_w == Din
    out_dtype = x.dtype

    # Lane-dense output: pad out_dim to a multiple of 128 (unmasked stores).
    Dout_p = _round_up(Dout, 128)
    if Dout_p != Dout:
        w = jnp.pad(w, ((0, 0), (0, Dout_p - Dout)))
        b = jnp.pad(b, ((0, 0), (0, Dout_p - Dout)))

    # Batch tile: multiple of 32 (int8 mask packs natively), sized so the
    # double-buffered streamed blocks (x f32 + mask i8 + out f32) stay well
    # inside the default scoped-VMEM budget.
    if tile_b is None:
        per_row = 2 * (x.dtype.itemsize * Din + 4 * Dout_p + 1 * Dout_p)
        tile_b = max(32, min(1024, (8 << 20) // max(per_row, 1)))
    tile_b = min(int(tile_b), _round_up(B, 32))
    tile_b = max(32, (tile_b // 32) * 32)
    B_p = _round_up(B, tile_b)
    if B_p != B:
        x = jnp.pad(x, ((0, B_p - B), (0, 0)))
    grid = (B_p // tile_b,)

    # Weights: one-time bf16 cast (halves resident-W DMA); bias stays f32.
    w_mxu = w.astype(jnp.bfloat16)
    b_f32 = b.astype(jnp.float32)

    use_dropout = bool(training) and float(do_rate) > 0.0
    if use_dropout:
        assert key is not None, "dropout in training mode needs a PRNG key"
        keep_prob = 1.0 - float(do_rate)
        if keep_prob <= 0.0:
            keep_prob, inv_keep = 0.0, 0.0
        else:
            inv_keep = 1.0 / keep_prob
        # Exact Bernoulli(keep_prob) mask, 1 byte/element, per-tile blocks so
        # every batch tile sees its own independent mask.
        keep_mask = jax.random.bernoulli(
            key, keep_prob, (B_p, Dout_p)).astype(jnp.int8)
    else:
        inv_keep = 1.0
        keep_mask = None

    kernel = functools.partial(
        _encoder_block_kernel,
        negative_slope=float(negative_slope),
        inv_keep=float(inv_keep),
    )

    in_specs = [
        pl.BlockSpec((tile_b, Din), lambda i: (i, 0)),      # x: tiled over batch
        pl.BlockSpec((Din, Dout_p), lambda i: (0, 0)),      # W: VMEM-resident
        pl.BlockSpec((1, Dout_p), lambda i: (0, 0)),        # b: VMEM-resident
    ]
    args = [x, w_mxu, b_f32]
    if use_dropout:
        in_specs.append(pl.BlockSpec((tile_b, Dout_p), lambda i: (i, 0)))
        args.append(keep_mask)

    out = pl.pallas_call(
        kernel,
        out_shape=jax.ShapeDtypeStruct((B_p, Dout_p), out_dtype),
        grid=grid,
        in_specs=in_specs,
        out_specs=pl.BlockSpec((tile_b, Dout_p), lambda i: (i, 0)),
        compiler_params=pltpu.CompilerParams(
            dimension_semantics=("parallel",)),
    )(*args)

    return out[:B, :Dout]


if __name__ == "__main__":
    # Small shapes consistent with the module: exercises batch tiling (3 grid
    # steps), row padding (380 -> 384) and lane padding (96 -> 128).
    B, IN_DIM, OUT_DIM = 380, 64, 96
    DO_RATE = 0.1
    TILE_B = 128

    key = jax.random.PRNGKey(0)
    kx, kw, kb, kdrop = jax.random.split(key, 4)

    x = jax.random.normal(kx, (B, IN_DIM), dtype=jnp.float32)

    # nn.Linear-style init: U(-1/sqrt(in), 1/sqrt(in)).
    bound = 1.0 / (IN_DIM ** 0.5)
    w = jax.random.uniform(kw, (IN_DIM, OUT_DIM), jnp.float32, -bound, bound)
    b = jax.random.uniform(kb, (1, OUT_DIM), jnp.float32, -bound, bound)

    # Pure-JAX reference for the deterministic part (Linear + LeakyReLU).
    y_ref = x @ w + b
    y_ref = jnp.where(y_ref >= 0.0, y_ref, 0.2 * y_ref)

    # Eval mode: dropout is identity -> must match the reference (bf16 matmul tol).
    out_eval = jax.block_until_ready(
        encoder_block(x, w, b, kdrop, do_rate=DO_RATE, training=False,
                      tile_b=TILE_B))
    assert out_eval.shape == (B, OUT_DIM)
    assert jnp.allclose(out_eval, y_ref, atol=2e-2, rtol=2e-2)

    # Training mode: each element is either 0 or ref/(1-p); keep rate ~ 1-p.
    out_train = jax.block_until_ready(
        encoder_block(x, w, b, kdrop, do_rate=DO_RATE, training=True,
                      tile_b=TILE_B))
    assert out_train.shape == (B, OUT_DIM)
    scaled_ref = y_ref / (1.0 - DO_RATE)
    is_zero = jnp.abs(out_train) <= 1e-6
    is_scaled = jnp.abs(out_train - scaled_ref) <= 2e-2 * (1.0 + jnp.abs(scaled_ref))
    assert bool(jnp.all(is_zero | is_scaled))
    keep_rate = float(jnp.mean((~is_zero).astype(jnp.float32)))
    assert abs(keep_rate - (1.0 - DO_RATE)) < 0.05, keep_rate

    print("KERNEL_OK")
</pallas_src>

<mosaic_0001>
module attributes {stable_mosaic.version = 11 : i64} {
  func.func @_encoder_block_kernel(%arg0: i32, %arg1: memref<128x64xf32, #tpu.memory_space<vmem>>, %arg2: memref<64x128xbf16, #tpu.memory_space<vmem>>, %arg3: memref<1x128xf32, #tpu.memory_space<vmem>>, %arg4: memref<128x128xf32, #tpu.memory_space<vmem>>) attributes {dimension_semantics = [#tpu.dimension_semantics<parallel>], iteration_bounds = array<i64: 3>, scalar_prefetch = 0 : i64, scratch_operands = 0 : i64, tpu.core_type = #tpu.core_type<tc>, window_params = [{transform_indices = @transform_0, window_bounds = array<i64: 128, 64>}, {pipeline_mode = #tpu.pipeline_mode<synchronous>, transform_indices = @transform_1, window_bounds = array<i64: 64, 128>}, {pipeline_mode = #tpu.pipeline_mode<synchronous>, transform_indices = @transform_2, window_bounds = array<i64: 1, 128>}, {transform_indices = @transform_3, window_bounds = array<i64: 128, 128>}]} {
    %c0 = arith.constant 0 : index
    %c0_0 = arith.constant 0 : index
    %0 = vector.load %arg1[%c0, %c0_0] : memref<128x64xf32, #tpu.memory_space<vmem>>, vector<128x64xf32>
    %1 = arith.truncf %0 : vector<128x64xf32> to vector<128x64xbf16>
    %c0_1 = arith.constant 0 : index
    %c0_2 = arith.constant 0 : index
    %2 = vector.load %arg2[%c0_1, %c0_2] : memref<64x128xbf16, #tpu.memory_space<vmem>>, vector<64x128xbf16>
    %cst = arith.constant dense<0.000000e+00> : vector<128x128xf32>
    %3 = tpu.matmul %1, %2, %cst {dimension_numbers = #tpu.dot_dimension_numbers<[1], [0], [0], [1], [0, 0, 1, 1], [], []>} : vector<128x64xbf16>, vector<64x128xbf16>, vector<128x128xf32> -> vector<128x128xf32>
    %c0_3 = arith.constant 0 : index
    %c0_4 = arith.constant 0 : index
    %4 = vector.load %arg3[%c0_3, %c0_4] : memref<1x128xf32, #tpu.memory_space<vmem>>, vector<1x128xf32>
    %5 = vector.broadcast %4 : vector<1x128xf32> to vector<128x128xf32>
    %6 = arith.addf %3, %5 : vector<128x128xf32>
    %cst_5 = arith.constant 2.000000e-01 : f32
    %7 = vector.broadcast %cst_5 : f32 to vector<128x128xf32>
    %8 = arith.mulf %7, %6 : vector<128x128xf32>
    %9 = arith.maximumf %6, %8 : vector<128x128xf32>
    %c0_6 = arith.constant 0 : index
    %c0_7 = arith.constant 0 : index
    %10 = vector.load %arg4[%c0_6, %c0_7] : memref<128x128xf32, #tpu.memory_space<vmem>>, vector<128x128xf32>
    tpu.vector_store %arg4[%c0_6, %c0_7], %9 {strides = array<i32>} : memref<128x128xf32, #tpu.memory_space<vmem>>, vector<128x128xf32>,
    return
  }
  func.func @transform_0(%arg0: i32) -> (i32, i32) {
    %c0_i32 = arith.constant 0 : i32
    %c0_i32_0 = arith.constant 0 : i32
    return %arg0, %c0_i32 : i32, i32
  }
  func.func @transform_1(%arg0: i32) -> (i32, i32) {
    %c0_i32 = arith.constant 0 : i32
    %c0_i32_0 = arith.constant 0 : i32
    %c0_i32_1 = arith.constant 0 : i32
    return %c0_i32, %c0_i32_0 : i32, i32
  }
  func.func @transform_2(%arg0: i32) -> (i32, i32) {
    %c0_i32 = arith.constant 0 : i32
    %c0_i32_0 = arith.constant 0 : i32
    %c0_i32_1 = arith.constant 0 : i32
    return %c0_i32, %c0_i32_0 : i32, i32
  }
  func.func @transform_3(%arg0: i32) -> (i32, i32) {
    %c0_i32 = arith.constant 0 : i32
    %c0_i32_0 = arith.constant 0 : i32
    return %arg0, %c0_i32 : i32, i32
  }
}

</mosaic_0001>

<llo_original>
// kernel: tpu_custom_call.1
$region0: #{tpu_custom_call.1}
  #allocation0 [shape = 'u32[]', space=smem, size = 0x4, offset = 0x4, fixed_abs, tag = 'smem constant byte address 0x4 - core index']
  #allocation1 [shape = 'u32[72,128]{1,0:T(1,128)}', space=vmem, size = 0x9000, scoped, tag = 'internal scratch']
  %s0 = inlined_call_operand.vmem [shape: f32[384,64], index: 0, kind: input, shape index: {}]
  %s1 = inlined_call_operand.vmem [shape: bf16[64,128], index: 1, kind: input, shape index: {}]
  %s2 = inlined_call_operand.vmem [shape: f32[1,128], index: 2, kind: input, shape index: {}]
  %s3 = inlined_call_operand.hbm [shape: f32[384,128], index: 3, kind: output, shape index: {}]
  %s4 = sld [smem:[#allocation0]]
  $region45: #{tpu_custom_call.1} parent=0
    _
  %s6 = ssub.s32 1, %s4
  %s7 = scalar_select 0, %s6, %s4
  $region1: #{tpu_custom_call.1} parent=0
    #allocation2 [shape = 'u8[131072]{0}', space=vmem, size = 0x20000, scoped, tag = 'output window, operand 0']
    #allocation3 [shape = 's32[2]{0}', space=sflag, size = 0x8, scoped, tag = 'scoped memory for tpu_custom_call.1']
    %8 = vsyncpa [#allocation3], 0
    %s9 = scalar_lea.sflag [#allocation3], 1
    %10 = vsyncpa %s9, 0
    loop: start=0, step=1, limit=5
    $region2: #{tpu_custom_call.1} parent=1 // loop_pre_header
      _
    $region3: #{tpu_custom_call.1} parent=1 // loop_header
      %s12 = sphi 0, %s16
      %p13 = scmp.ge.s32.totalorder %s12, 5
      %s22 = sphi 0, %s24
      %s25 = sphi 0, %s22
      %s26 = sphi 0, %s25
      %s42 = sphi 0, %s26
      %s46 = sphi 0, %s46
      %s48 = sphi 0, %s46
      %s49 = sphi 0, %s48
      %s63 = sphi 0, %s49
      %s67 = sphi 0, %s67
      %s69 = sphi 0, %s67
      %s70 = sphi 0, %s69
      %s84 = sphi 0, %s70
      %s90 = sphi 0, %s92
      %s93 = sphi 0, %s90
      %s94 = sphi 0, %s93
      %s110 = sphi 0, %s94
    $region4: #{tpu_custom_call.1} parent=1 // loop_header_branch
      %15 = sbr.rel (%p13) target = $region8
    $region5: #{tpu_custom_call.1} parent=1 // loop_body
      %s17 = ssub.s32 %s12, 1
      %s18 = ssub.s32 %s12, 2
      %s19 = sadd.s32 %s12, 1
      %s20 = ssub.s32 %s12, %s19
      %p21 = scmp.eq.s32.totalorder %s20, 0
      %s23 = sadd.s32 %s22, 1
      %s24 = scalar_select %p21, %s22, %s23
      %p27 = pneg %p21
      %p28 = scmp.eq.s32.totalorder %s12, 2
      %p29 = por %p27, %p28
      %p30 = scmp.ne.s32.totalorder %s22, %s25
      %p31 = scmp.eq.s32.totalorder %s12, 0
      %p32 = por %p30, %p31
      %p33 = scmp.ne.s32.totalorder %s22, %s25
      %p34 = scmp.eq.s32.totalorder %s17, 2
      %p35 = por %p33, %p34
      %p36 = scmp.ne.s32.totalorder %s25, %s26
      %p37 = scmp.eq.s32.totalorder %s17, 0
      %p38 = por %p36, %p37
      %p39 = scmp.ne.s32.totalorder %s25, %s26
      %p40 = scmp.eq.s32.totalorder %s18, 2
      %p41 = por %p39, %p40
      %p43 = scmp.ne.s32.totalorder %s26, %s42
      %p44 = scmp.eq.s32.totalorder %s18, 0
      %p45 = por %p43, %p44
      %s47 = sadd.s32 %s46, 1
      %p50 = scmp.eq.s32.totalorder %s12, 2
      %p51 = scmp.ne.s32.totalorder %s46, %s48
      %p52 = scmp.eq.s32.totalorder %s12, 0
      %p53 = por %p51, %p52
      %p54 = scmp.ne.s32.totalorder %s46, %s48
      %p55 = scmp.eq.s32.totalorder %s17, 2
      %p56 = por %p54, %p55
      %p57 = scmp.ne.s32.totalorder %s48, %s49
      %p58 = scmp.eq.s32.totalorder %s17, 0
      %p59 = por %p57, %p58
      %p60 = scmp.ne.s32.totalorder %s48, %s49
      %p61 = scmp.eq.s32.totalorder %s18, 2
      %p62 = por %p60, %p61
      %p64 = scmp.ne.s32.totalorder %s49, %s63
      %p65 = scmp.eq.s32.totalorder %s18, 0
      %p66 = por %p64, %p65
      %s68 = sadd.s32 %s67, 1
      %p71 = scmp.eq.s32.totalorder %s12, 2
      %p72 = scmp.ne.s32.totalorder %s67, %s69
      %p73 = scmp.eq.s32.totalorder %s12, 0
      %p74 = por %p72, %p73
      %p75 = scmp.ne.s32.totalorder %s67, %s69
      %p76 = scmp.eq.s32.totalorder %s17, 2
      %p77 = por %p75, %p76
      %p78 = scmp.ne.s32.totalorder %s69, %s70
      %p79 = scmp.eq.s32.totalorder %s17, 0
      %p80 = por %p78, %p79
      %p81 = scmp.ne.s32.totalorder %s69, %s70
      %p82 = scmp.eq.s32.totalorder %s18, 2
      %p83 = por %p81, %p82
      %p85 = scmp.ne.s32.totalorder %s70, %s84
      %p86 = scmp.eq.s32.totalorder %s18, 0
      %p87 = por %p85, %p86
      %s88 = ssub.s32 %s12, %s19
      %p89 = scmp.eq.s32.totalorder %s88, 0
      %s91 = sadd.s32 %s90, 1
      %s92 = scalar_select %p89, %s90, %s91
      %p95 = pneg %p89
      %p96 = scmp.eq.s32.totalorder %s12, 2
      %p97 = por %p95, %p96
      %p98 = scmp.ne.s32.totalorder %s90, %s93
      %p99 = scmp.eq.s32.totalorder %s12, 0
      %p100 = por %p98, %p99
      %p101 = scmp.ne.s32.totalorder %s90, %s93
      %p102 = scmp.eq.s32.totalorder %s17, 2
      %p103 = por %p101, %p102
      %p104 = scmp.ne.s32.totalorder %s93, %s94
      %p105 = scmp.eq.s32.totalorder %s17, 0
      %p106 = por %p104, %p105
      %p107 = scmp.ne.s32.totalorder %s93, %s94
      %p108 = scmp.eq.s32.totalorder %s18, 2
      %p109 = por %p107, %p108
      %p111 = scmp.ne.s32.totalorder %s94, %s110
      %p112 = scmp.eq.s32.totalorder %s18, 0
      %p113 = por %p111, %p112
      %p114 = scmp.le.s32.totalorder 1, %s12
      %p115 = scmp.lt.s32.totalorder %s12, 4
      %p116 = pnand %p114, %p115
      %p117 = pneg %p116
      // Predicated region
      $region9: #{tpu_custom_call.1} parent=5 // pred_check
        _
      $region10: #{tpu_custom_call.1} parent=5 // pred_check_branch
        %119 = sbr.rel (%p116) target = $region12
      $region11: #{tpu_custom_call.1} parent=5 // pred_region
        %s120 = ssub.s32 %s12, 1
        // Predicated region
        $region13: #{tpu_custom_call.1} parent=11 // pred_check
          %p121 = pneg %p59
        $region14: #{tpu_custom_call.1} parent=11 // pred_check_branch
          %123 = sbr.rel (%p121) target = $region16
        $region15: #{tpu_custom_call.1} parent=11 // pred_region
          _
        $region16: #{tpu_custom_call.1} parent=11 // pred_fallthru
          _
        // Predicated region
        $region17: #{tpu_custom_call.1} parent=11 // pred_check
          %p124 = pneg %p80
        $region18: #{tpu_custom_call.1} parent=11 // pred_check_branch
          %126 = sbr.rel (%p124) target = $region20
        $region19: #{tpu_custom_call.1} parent=11 // pred_region
          _
        $region20: #{tpu_custom_call.1} parent=11 // pred_fallthru
          _
      $region12: #{tpu_custom_call.1} parent=5 // pred_fallthru
        _
      %p127 = scmp.lt.s32.totalorder %s12, 3
      // Predicated region
      $region21: #{tpu_custom_call.1} parent=5 // pred_check
        %p128 = pneg %p127
      $region22: #{tpu_custom_call.1} parent=5 // pred_check_branch
        %130 = sbr.rel (%p128) target = $region24
      $region23: #{tpu_custom_call.1} parent=5 // pred_region
        // Predicated region
        $region25: #{tpu_custom_call.1} parent=23 // pred_check
          %p131 = pneg %p32
        $region26: #{tpu_custom_call.1} parent=23 // pred_check_branch
          %133 = sbr.rel (%p131) target = $region28
        $region27: #{tpu_custom_call.1} parent=23 // pred_region
          %s134 = smul.u32 16, %s12
          %p135 = scmp.lt.s32.totalorder %s134, 47
          %s136 = scalar_select %p135, %s134, 47
          %s137 = smul.addr %s136, 8
          %s138 = scalar_lea.vmem %s0, %s137
          %s139 = smul.u32 16, %s12
        $region28: #{tpu_custom_call.1} parent=23 // pred_fallthru
          _
      $region24: #{tpu_custom_call.1} parent=5 // pred_fallthru
        _
      %p140 = scmp.le.s32.totalorder 1, %s12
      %p141 = scmp.lt.s32.totalorder %s12, 4
      %p142 = pnand %p140, %p141
      %p143 = pneg %p142
      // Predicated region
      $region29: #{tpu_custom_call.1} parent=5 // pred_check
        _
      $region30: #{tpu_custom_call.1} parent=5 // pred_check_branch
        %145 = sbr.rel (%p142) target = $region32
      $region31: #{tpu_custom_call.1} parent=5 // pred_region
        %s146 = ssub.s32 %s12, 1
        %s147 = smul.u32 16, %s17
        %p148 = scmp.lt.s32.totalorder %s147, 47
        %s149 = scalar_select %p148, %s147, 47
        %s150 = smul.addr %s149, 8
        %s151 = scalar_lea.vmem %s0, %s150
        %p152 = pneg %p38
        %p153 = pneg %p35
        %p154 = pneg %p59
        %p155 = pneg %p56
        %p156 = pneg %p80
        %p157 = pneg %p77
        %p158 = pneg %p106
        %p159 = pneg %p103
        %s160 = sand.u32 %s93, 1
        %s161 = scalar_lea.sflag [#allocation3], %s160
        %s162 = sand.u32 %s93, 1
        %s163 = smul.addr %s162, 128
        %s164 = scalar_lea.vmem [#allocation2], %s163
        %s165 = smul.u32 16, %s17
        %p166 = scmp.lt.s32.totalorder %s165, 47
        %s167 = scalar_select %p166, %s165, 47
        %s168 = smul.addr %s167, 8
        %s169 = scalar_lea.vmem %s0, %s168
        %s170 = smul.u32 16, %s17
        %s171 = smul.u32 16, %s17
        %v173 = vld [vmem:[%s169] sm:$0xff]
        %v174 = vld [vmem:[%s169 + $0x8] sm:$0xff]
        %v175 = vld [vmem:[%s169 + $0x10] sm:$0xff]
        %v176 = vld [vmem:[%s169 + $0x18] sm:$0xff]
        %v177 = vld [vmem:[%s169 + $0x20] sm:$0xff]
        %v178 = vld [vmem:[%s169 + $0x28] sm:$0xff]
        %v179 = vld [vmem:[%s169 + $0x30] sm:$0xff]
        %v180 = vld [vmem:[%s169 + $0x38] sm:$0xff]
        %v181 = vld [vmem:[%s169 + $0x40] sm:$0xff]
        %v182 = vld [vmem:[%s169 + $0x48] sm:$0xff]
        %v183 = vld [vmem:[%s169 + $0x50] sm:$0xff]
        %v184 = vld [vmem:[%s169 + $0x58] sm:$0xff]
        %v185 = vld [vmem:[%s169 + $0x60] sm:$0xff]
        %v186 = vld [vmem:[%s169 + $0x68] sm:$0xff]
        %v187 = vld [vmem:[%s169 + $0x70] sm:$0xff]
        %v188 = vld [vmem:[%s169 + $0x78] sm:$0xff]
        %v189 = vpack.c.bf16 %v174, %v173
        %v190 = vpack.c.bf16 %v176, %v175
        %v191 = vpack.c.bf16 %v178, %v177
        %v192 = vpack.c.bf16 %v180, %v179
        %v193 = vpack.c.bf16 %v182, %v181
        %v194 = vpack.c.bf16 %v184, %v183
        %v195 = vpack.c.bf16 %v186, %v185
        %v196 = vpack.c.bf16 %v188, %v187
        %v197 = vld [vmem:[%s1] sm:$0xf]
        %v198 = vld [vmem:[%s1 + $0x4] sm:$0xf]
        %v199 = vld [vmem:[%s1 + $0x8] sm:$0xf]
        %v200 = vld [vmem:[%s1 + $0xc] sm:$0xf]
        %v201 = vld [vmem:[%s1 + $0x10] sm:$0xf]
        %v202 = vld [vmem:[%s1 + $0x14] sm:$0xf]
        %v203 = vld [vmem:[%s1 + $0x18] sm:$0xf]
        %v204 = vld [vmem:[%s1 + $0x1c] sm:$0xf]
        %v205 = vld [vmem:[%s2] sm:$0x1]
        %v207 = vperm.slane %v205, 0
        %v217 = vunpack.c.l.b16 %v197
        %v218 = vunpack.c.l.b16 %v198
        %v219 = vunpack.c.l.b16 %v199
        %v220 = vunpack.c.l.b16 %v200
        %v221 = vunpack.c.l.b16 %v201
        %v222 = vunpack.c.l.b16 %v202
        %v223 = vunpack.c.l.b16 %v203
        %v224 = vunpack.c.l.b16 %v204
        %v225 = vpack.c.b16 %v218, %v217
        %v226 = vpack.c.b16 %v220, %v219
        %v227 = vpack.c.b16 %v222, %v221
        %v228 = vpack.c.b16 %v224, %v223
        %vm233 = vcmask 523264
        %v235 = vsel %vm233, %v189, 0
        %v238 = vsel %vm233, %v190, 0
        %v241 = vsel %vm233, %v191, 0
        %v244 = vsel %vm233, %v192, 0
        %v247 = vsel %vm233, %v193, 0
        %v250 = vsel %vm233, %v194, 0
        %v253 = vsel %vm233, %v195, 0
        %v256 = vsel %vm233, %v196, 0
        %258 = vmatpush.bf16.msra.mxu0 0
        %259 = vmatpush.bf16.msra.mxu0 0
        %260 = vmatpush.bf16.msra.mxu0 0
        %261 = vmatpush.bf16.msra.mxu0 0
        %262 = vmatpush.bf16.msra.mxu0 %v228
        %263 = vmatpush.bf16.msra.mxu0 %v227
        %264 = vmatpush.bf16.msra.mxu0 %v226
        %265 = vmatpush.bf16.msra.mxu0 %v225
        %266 = vmatmul.bf16.gmra.mxu0 %v235
        %v267 = vpop.f32.mrf.mxu0
        %v268 = vadd.f32 %v207, %v267
        %v269 = vpop.f32.mrf.mxu0
        %v270 = vadd.f32 %v207, %v269
        %271 = vmatmul.bf16.gmra.mxu0 %v238
        %v272 = vpop.f32.mrf.mxu0
        %v273 = vadd.f32 %v207, %v272
        %v274 = vpop.f32.mrf.mxu0
        %v275 = vadd.f32 %v207, %v274
        %276 = vmatmul.bf16.gmra.mxu0 %v241
        %v277 = vpop.f32.mrf.mxu0
        %v278 = vadd.f32 %v207, %v277
        %v279 = vpop.f32.mrf.mxu0
        %v280 = vadd.f32 %v207, %v279
        %281 = vmatmul.bf16.gmra.mxu0 %v244
        %v282 = vpop.f32.mrf.mxu0
        %v283 = vadd.f32 %v207, %v282
        %v284 = vpop.f32.mrf.mxu0
        %v285 = vadd.f32 %v207, %v284
        %286 = vmatmul.bf16.gmra.mxu0 %v247
        %v287 = vpop.f32.mrf.mxu0
        %v288 = vadd.f32 %v207, %v287
        %v289 = vpop.f32.mrf.mxu0
        %v290 = vadd.f32 %v207, %v289
        %291 = vmatmul.bf16.gmra.mxu0 %v250
        %v292 = vpop.f32.mrf.mxu0
        %v293 = vadd.f32 %v207, %v292
        %v294 = vpop.f32.mrf.mxu0
        %v295 = vadd.f32 %v207, %v294
        %296 = vmatmul.bf16.gmra.mxu0 %v253
        %v297 = vpop.f32.mrf.mxu0
        %v298 = vadd.f32 %v207, %v297
        %v299 = vpop.f32.mrf.mxu0
        %v300 = vadd.f32 %v207, %v299
        %301 = vmatmul.bf16.gmra.mxu0 %v256
        %v302 = vpop.f32.mrf.mxu0
        %v303 = vadd.f32 %v207, %v302
        %v304 = vpop.f32.mrf.mxu0
        %v305 = vadd.f32 %v207, %v304
        %306 = vdwg.mxu0
        %v307 = vmul.f32 %v268, 0.2
        %v308 = vmul.f32 %v270, 0.2
        %v309 = vmul.f32 %v273, 0.2
        %v310 = vmul.f32 %v275, 0.2
        %v311 = vmul.f32 %v278, 0.2
        %v312 = vmul.f32 %v280, 0.2
        %v313 = vmul.f32 %v283, 0.2
        %v314 = vmul.f32 %v285, 0.2
        %v315 = vmul.f32 %v288, 0.2
        %v316 = vmul.f32 %v290, 0.2
        %v317 = vmul.f32 %v293, 0.2
        %v318 = vmul.f32 %v295, 0.2
        %v319 = vmul.f32 %v298, 0.2
        %v320 = vmul.f32 %v300, 0.2
        %v321 = vmul.f32 %v303, 0.2
        %v322 = vmul.f32 %v305, 0.2
        %v323 = vmax.f32 %v268, %v307
        %v324 = vmax.f32 %v270, %v308
        %v325 = vmax.f32 %v273, %v309
        %v326 = vmax.f32 %v275, %v310
        %v327 = vmax.f32 %v278, %v311
        %v328 = vmax.f32 %v280, %v312
        %v329 = vmax.f32 %v283, %v313
        %v330 = vmax.f32 %v285, %v314
        %v331 = vmax.f32 %v288, %v315
        %v332 = vmax.f32 %v290, %v316
        %v333 = vmax.f32 %v293, %v317
        %v334 = vmax.f32 %v295, %v318
        %v335 = vmax.f32 %v298, %v319
        %v336 = vmax.f32 %v300, %v320
        %v337 = vmax.f32 %v303, %v321
        %v338 = vmax.f32 %v305, %v322
        %339 = vst [vmem:[%s164] sm:$0xff] %v323
        %340 = vst [vmem:[%s164 + $0x8] sm:$0xff] %v324
        %341 = vst [vmem:[%s164 + $0x10] sm:$0xff] %v325
        %342 = vst [vmem:[%s164 + $0x18] sm:$0xff] %v326
        %343 = vst [vmem:[%s164 + $0x20] sm:$0xff] %v327
        %344 = vst [vmem:[%s164 + $0x28] sm:$0xff] %v328
        %345 = vst [vmem:[%s164 + $0x30] sm:$0xff] %v329
        %346 = vst [vmem:[%s164 + $0x38] sm:$0xff] %v330
        %347 = vst [vmem:[%s164 + $0x40] sm:$0xff] %v331
        %348 = vst [vmem:[%s164 + $0x48] sm:$0xff] %v332
        %349 = vst [vmem:[%s164 + $0x50] sm:$0xff] %v333
        %350 = vst [vmem:[%s164 + $0x58] sm:$0xff] %v334
        %351 = vst [vmem:[%s164 + $0x60] sm:$0xff] %v335
        %352 = vst [vmem:[%s164 + $0x68] sm:$0xff] %v336
        %353 = vst [vmem:[%s164 + $0x70] sm:$0xff] %v337
        %354 = vst [vmem:[%s164 + $0x78] sm:$0xff] %v338
        %s355 = sand.u32 %s93, 1
        %s356 = scalar_lea.sflag [#allocation3], %s355
        %s357 = sand.u32 %s93, 1
        %s358 = smul.addr %s357, 128
        %s359 = scalar_lea.vmem [#allocation2], %s358
        // Predicated region
        $region33: #{tpu_custom_call.1} parent=31 // pred_check
          %p360 = pneg %p103
        $region34: #{tpu_custom_call.1} parent=31 // pred_check_branch
          %362 = sbr.rel (%p360) target = $region36
        $region35: #{tpu_custom_call.1} parent=31 // pred_region
          %s363 = smul.u32 16, %s17
          %365 = vsyncadd %s356, 0
          %s366 = smul.addr %s363, 8
          %s367 = scalar_lea.hbm %s3, %s366
          %s368 = sshll.u32 %s359, 4
          %s369 = int_to_ptr.vmem [resolvable:$true] %s368
          %s370 = sshll.u32 %s367, 4
          %s371 = int_to_ptr.hbm [resolvable:$true] %s370
          %376 = dma.vmem_to_hbm [thread:$0]  %s369, 2048, %s371, %s356, 128, 128, 8
        $region36: #{tpu_custom_call.1} parent=31 // pred_fallthru
          _
      $region32: #{tpu_custom_call.1} parent=5 // pred_fallthru
        _
      %p377 = scmp.le.s32.totalorder 2, %s12
      // Predicated region
      $region37: #{tpu_custom_call.1} parent=5 // pred_check
        %p378 = pneg %p377
      $region38: #{tpu_custom_call.1} parent=5 // pred_check_branch
        %380 = sbr.rel (%p378) target = $region40
      $region39: #{tpu_custom_call.1} parent=5 // pred_region
        %s381 = ssub.s32 %s12, 2
        // Predicated region
        $region41: #{tpu_custom_call.1} parent=39 // pred_check
          %p382 = pneg %p109
        $region42: #{tpu_custom_call.1} parent=39 // pred_check_branch
          %384 = sbr.rel (%p382) target = $region44
        $region43: #{tpu_custom_call.1} parent=39 // pred_region
          %s385 = sand.u32 %s94, 1
          %s386 = scalar_lea.sflag [#allocation3], %s385
          %s387 = sand.u32 %s94, 1
          %s388 = smul.addr %s387, 128
          %s389 = scalar_lea.vmem [#allocation2], %s388
          %391 = dma.done %s386, 2048
        $region44: #{tpu_custom_call.1} parent=39 // pred_fallthru
          _
      $region40: #{tpu_custom_call.1} parent=5 // pred_fallthru
        _
    $region6: #{tpu_custom_call.1} parent=1 // loop_footer
      %s16 = sadd.s32 1, %s12
    $region7: #{tpu_custom_call.1} parent=1 // loop_footer_branch
      %11 = sbr.rel target = $region3
    $region8: #{tpu_custom_call.1} parent=1 // loop_exit
      _
    %392 = vsyncpa [#allocation3], 1
    %s393 = scalar_lea.sflag [#allocation3], 1
    %394 = vsyncpa %s393, 1

</llo_original>
